<compile_context>
chip_gen: v7x
topology: tpu7x:2x2x1
jax: 0.10.0
libtpu: 0.0.40
codegen_flags: <defaults>
</compile_context>

<pallas_src>
import jax
import jax.numpy as jnp
from jax.experimental import pallas as pl
from jax.experimental.pallas import tpu as pltpu

HID = 64


def _round_up(n, m):
    return ((n + m - 1) // m) * m


def _gaussian_kernel(se_ref, w1_ref, b1_ref, w2_ref, b2_ref, w3_ref, b3_ref, out_ref):
    # se_ref: (2, TB) f32 with batch on lanes; row 0 = s, row 1 = eps.
    s = se_ref[0:1, :]                                                # (1, TB)
    eps = se_ref[1:2, :]                                              # (1, TB)

    # Layer 1 (both heads fused): Linear(1,64) x2 as a broadcast FMA on the VPU.
    h1 = jnp.maximum(w1_ref[...] * s + b1_ref[...], 0.0)              # (128, TB) f32

    # Layer 2: single block-diagonal 128x128 bf16 MXU matmul, f32 accumulation.
    h2 = jnp.dot(w2_ref[...], h1.astype(jnp.bfloat16),
                 preferred_element_type=jnp.float32)                  # (128, TB) f32
    h2 = jnp.maximum(h2 + b2_ref[...], 0.0)                           # (128, TB) f32

    # Layer 3: (2,128) bf16 matmul folds both heads' 64->1 reductions into the MXU.
    y = jnp.dot(w3_ref[...], h2.astype(jnp.bfloat16),
                preferred_element_type=jnp.float32)                   # (2, TB) f32
    y = y + b3_ref[...]                                               # (2, TB)

    mean = y[0:1, :]
    log_std = y[1:2, :]
    out_ref[...] = mean + jnp.exp(log_std) * eps                      # (1, TB) f32


def gaussian_forward(s, eps, params, *, tb=2048):
    """Reparameterized sample of Normal(mean(s), exp(log_std(s))).

    s, eps: (B, 1) float32.  params: fused kernel-layout weights (see pack_params).
    """
    w1, b1, w2, b2, w3, b3 = params
    B = s.shape[0]

    # Lane-aligned batch tile; don't over-pad tiny batches.
    b_aligned = _round_up(B, 128)
    tb = max(128, min(tb, b_aligned))
    # v7x: if the batch spans >= 2 lane tiles, cap tb so there are >= 2 grid
    # steps and both TensorCores get a "parallel" slice of the grid.
    if b_aligned >= 256:
        tb = min(tb, _round_up((b_aligned + 1) // 2, 128))
    tb = _round_up(tb, 128)
    Bp = _round_up(B, tb)

    # Single stacked input: row 0 = s, row 1 = eps, batch on the lane axis.
    se = jnp.stack([s.reshape(-1), eps.reshape(-1)]).astype(jnp.float32)   # (2, B)
    se = jnp.pad(se, ((0, 0), (0, Bp - B)))                                # (2, Bp)

    se_spec = pl.BlockSpec((2, tb), lambda i: (0, i))

    def const(a):
        return pl.BlockSpec(a.shape, lambda i: (0, 0))

    flops = int(2 * Bp * (2 * HID + (2 * HID) ** 2 + 2 * (2 * HID)))
    bytes_accessed = int(3 * Bp * 4 + sum(int(a.size) * a.dtype.itemsize for a in params))

    out = pl.pallas_call(
        _gaussian_kernel,
        out_shape=jax.ShapeDtypeStruct((1, Bp), jnp.float32),
        grid=(Bp // tb,),
        in_specs=[se_spec,
                  const(w1), const(b1), const(w2), const(b2), const(w3), const(b3)],
        out_specs=pl.BlockSpec((1, tb), lambda i: (0, i)),
        compiler_params=pltpu.CompilerParams(
            dimension_semantics=("parallel",)),
        cost_estimate=pl.CostEstimate(
            flops=flops, transcendentals=int(Bp), bytes_accessed=bytes_accessed),
    )(se, w1, b1, w2, b2, w3, b3)

    return out[:, :B].reshape(B, 1)


def init_params(key):
    """PyTorch-style uniform init; returns per-head weights in torch (out, in) layout."""
    def linear(k, fan_in, fan_out):
        kw, kb = jax.random.split(k)
        bound = 1.0 / jnp.sqrt(float(fan_in))
        w = jax.random.uniform(kw, (fan_out, fan_in), jnp.float32, -bound, bound)
        b = jax.random.uniform(kb, (fan_out,), jnp.float32, -bound, bound)
        return w, b

    keys = jax.random.split(key, 6)
    heads = []
    for h in range(2):                                   # 0: mean head, 1: log_std head
        w1, b1 = linear(keys[3 * h + 0], 1, HID)         # (64, 1), (64,)
        w2, b2 = linear(keys[3 * h + 1], HID, HID)       # (64, 64), (64,)
        w3, b3 = linear(keys[3 * h + 2], HID, 1)         # (1, 64), (1,)
        heads.append((w1, b1, w2, b2, w3, b3))
    return heads


def pack_params(heads):
    """Fuse both heads into one 128-wide block-diagonal parameter set (kernel layout)."""
    w1m, b1m, w2m, b2m, w3m, b3m = heads[0]
    w1l, b1l, w2l, b2l, w3l, b3l = heads[1]

    w1 = jnp.concatenate([w1m, w1l], axis=0)                                 # (128, 1) f32
    b1 = jnp.concatenate([b1m, b1l], axis=0).reshape(2 * HID, 1)             # (128, 1) f32
    z = jnp.zeros((HID, HID), jnp.float32)
    w2 = jnp.block([[w2m, z], [z, w2l]]).astype(jnp.bfloat16)                # (128, 128) bf16
    b2 = jnp.concatenate([b2m, b2l], axis=0).reshape(2 * HID, 1)             # (128, 1) f32
    zr = jnp.zeros((1, HID), jnp.float32)
    w3 = jnp.concatenate([jnp.concatenate([w3m, zr], axis=1),
                          jnp.concatenate([zr, w3l], axis=1)],
                         axis=0).astype(jnp.bfloat16)                        # (2, 128) bf16
    b3 = jnp.concatenate([b3m, b3l], axis=0).reshape(2, 1)                   # (2, 1) f32
    return (w1, b1, w2, b2, w3, b3)


def _mlp_ref(s, w1, b1, w2, b2, w3, b3):
    """Plain-JAX f32 reference in torch (batch, feature) layout."""
    h = jnp.maximum(s @ w1.T + b1, 0.0)
    h = jnp.maximum(h @ w2.T + b2, 0.0)
    return h @ w3.T + b3


# TODO(synk): torch.optim.Adam / maximize() (training) and log_prob() are host/JAX-level
# utilities, not part of the forward pass; they are not kernelized here.

if __name__ == "__main__":
    key = jax.random.PRNGKey(0)
    kp, ks, ke = jax.random.split(key, 3)
    heads = init_params(kp)
    params = pack_params(heads)

    B = 256                                           # small batch; 2 lane-aligned tiles
    s = jax.random.normal(ks, (B, 1), jnp.float32)
    eps = jax.random.normal(ke, (B, 1), jnp.float32)  # reparameterization noise

    out = gaussian_forward(s, eps, params)
    jax.block_until_ready(out)

    # Reference: mean + exp(log_std) * eps, computed with plain JAX in f32.
    w1m, b1m, w2m, b2m, w3m, b3m = heads[0]
    w1l, b1l, w2l, b2l, w3l, b3l = heads[1]
    mean_ref = _mlp_ref(s, w1m, b1m, w2m, b2m, w3m, b3m)
    std_ref = jnp.exp(_mlp_ref(s, w1l, b1l, w2l, b2l, w3l, b3l))
    ref = mean_ref + std_ref * eps

    assert out.shape == (B, 1)
    # Kernel matmuls use bf16 operands (f32 accumulation), so tolerance is bf16-level.
    assert jnp.allclose(out, ref, atol=2e-2, rtol=2e-2), float(jnp.max(jnp.abs(out - ref)))

    print("KERNEL_OK")
</pallas_src>

<mosaic_0001>
module attributes {stable_mosaic.version = 11 : i64} {
  func.func @_gaussian_kernel(%arg0: i32, %arg1: memref<2x128xf32, #tpu.memory_space<vmem>>, %arg2: memref<128x1xf32, #tpu.memory_space<vmem>>, %arg3: memref<128x1xf32, #tpu.memory_space<vmem>>, %arg4: memref<128x128xbf16, #tpu.memory_space<vmem>>, %arg5: memref<128x1xf32, #tpu.memory_space<vmem>>, %arg6: memref<2x128xbf16, #tpu.memory_space<vmem>>, %arg7: memref<2x1xf32, #tpu.memory_space<vmem>>, %arg8: memref<1x128xf32, #tpu.memory_space<vmem>>) attributes {dimension_semantics = [#tpu.dimension_semantics<parallel>], iteration_bounds = array<i64: 2>, scalar_prefetch = 0 : i64, scratch_operands = 0 : i64, tpu.core_type = #tpu.core_type<tc>, window_params = [{transform_indices = @transform_0, window_bounds = array<i64: 2, 128>}, {pipeline_mode = #tpu.pipeline_mode<synchronous>, transform_indices = @transform_1, window_bounds = array<i64: 128, 1>}, {pipeline_mode = #tpu.pipeline_mode<synchronous>, transform_indices = @transform_2, window_bounds = array<i64: 128, 1>}, {pipeline_mode = #tpu.pipeline_mode<synchronous>, transform_indices = @transform_3, window_bounds = array<i64: 128, 128>}, {pipeline_mode = #tpu.pipeline_mode<synchronous>, transform_indices = @transform_4, window_bounds = array<i64: 128, 1>}, {pipeline_mode = #tpu.pipeline_mode<synchronous>, transform_indices = @transform_5, window_bounds = array<i64: 2, 128>}, {pipeline_mode = #tpu.pipeline_mode<synchronous>, transform_indices = @transform_6, window_bounds = array<i64: 2, 1>}, {transform_indices = @transform_7, window_bounds = array<i64: 1, 128>}]} {
    %c0 = arith.constant 0 : index
    %c0_0 = arith.constant 0 : index
    %0 = vector.load %arg1[%c0, %c0_0] : memref<2x128xf32, #tpu.memory_space<vmem>>, vector<1x128xf32>
    %c1 = arith.constant 1 : index
    %c0_1 = arith.constant 0 : index
    %1 = vector.load %arg1[%c1, %c0_1] : memref<2x128xf32, #tpu.memory_space<vmem>>, vector<1x128xf32>
    %c0_2 = arith.constant 0 : index
    %c0_3 = arith.constant 0 : index
    %2 = vector.load %arg2[%c0_2, %c0_3] : memref<128x1xf32, #tpu.memory_space<vmem>>, vector<128x1xf32>
    %3 = vector.broadcast %2 : vector<128x1xf32> to vector<128x128xf32>
    %4 = vector.broadcast %0 : vector<1x128xf32> to vector<128x128xf32>
    %5 = arith.mulf %3, %4 : vector<128x128xf32>
    %c0_4 = arith.constant 0 : index
    %c0_5 = arith.constant 0 : index
    %6 = vector.load %arg3[%c0_4, %c0_5] : memref<128x1xf32, #tpu.memory_space<vmem>>, vector<128x1xf32>
    %7 = vector.broadcast %6 : vector<128x1xf32> to vector<128x128xf32>
    %8 = arith.addf %5, %7 : vector<128x128xf32>
    %cst = arith.constant 0.000000e+00 : f32
    %9 = vector.broadcast %cst : f32 to vector<128x128xf32>
    %10 = arith.maximumf %8, %9 : vector<128x128xf32>
    %c0_6 = arith.constant 0 : index
    %c0_7 = arith.constant 0 : index
    %11 = vector.load %arg4[%c0_6, %c0_7] : memref<128x128xbf16, #tpu.memory_space<vmem>>, vector<128x128xbf16>
    %12 = arith.truncf %10 : vector<128x128xf32> to vector<128x128xbf16>
    %cst_8 = arith.constant dense<0.000000e+00> : vector<128x128xf32>
    %13 = tpu.matmul %11, %12, %cst_8 {dimension_numbers = #tpu.dot_dimension_numbers<[1], [0], [0], [1], [0, 0, 1, 1], [], []>} : vector<128x128xbf16>, vector<128x128xbf16>, vector<128x128xf32> -> vector<128x128xf32>
    %c0_9 = arith.constant 0 : index
    %c0_10 = arith.constant 0 : index
    %14 = vector.load %arg5[%c0_9, %c0_10] : memref<128x1xf32, #tpu.memory_space<vmem>>, vector<128x1xf32>
    %15 = vector.broadcast %14 : vector<128x1xf32> to vector<128x128xf32>
    %16 = arith.addf %13, %15 : vector<128x128xf32>
    %cst_11 = arith.constant 0.000000e+00 : f32
    %17 = vector.broadcast %cst_11 : f32 to vector<128x128xf32>
    %18 = arith.maximumf %16, %17 : vector<128x128xf32>
    %c0_12 = arith.constant 0 : index
    %c0_13 = arith.constant 0 : index
    %19 = vector.load %arg6[%c0_12, %c0_13] : memref<2x128xbf16, #tpu.memory_space<vmem>>, vector<2x128xbf16>
    %20 = arith.truncf %18 : vector<128x128xf32> to vector<128x128xbf16>
    %cst_14 = arith.constant dense<0.000000e+00> : vector<2x128xf32>
    %21 = tpu.matmul %19, %20, %cst_14 {dimension_numbers = #tpu.dot_dimension_numbers<[1], [0], [0], [1], [0, 0, 1, 1], [], []>} : vector<2x128xbf16>, vector<128x128xbf16>, vector<2x128xf32> -> vector<2x128xf32>
    %c0_15 = arith.constant 0 : index
    %c0_16 = arith.constant 0 : index
    %22 = vector.load %arg7[%c0_15, %c0_16] : memref<2x1xf32, #tpu.memory_space<vmem>>, vector<2x1xf32>
    %23 = vector.broadcast %22 : vector<2x1xf32> to vector<2x128xf32>
    %24 = arith.addf %21, %23 : vector<2x128xf32>
    %25 = vector.extract_strided_slice %24 {offsets = [0, 0], sizes = [1, 128], strides = [1, 1]} : vector<2x128xf32> to vector<1x128xf32>
    %26 = vector.extract_strided_slice %24 {offsets = [1, 0], sizes = [1, 128], strides = [1, 1]} : vector<2x128xf32> to vector<1x128xf32>
    %27 = math.exp %26 : vector<1x128xf32>
    %28 = arith.mulf %27, %1 : vector<1x128xf32>
    %29 = arith.addf %25, %28 : vector<1x128xf32>
    %c0_17 = arith.constant 0 : index
    %c0_18 = arith.constant 0 : index
    %30 = vector.load %arg8[%c0_17, %c0_18] : memref<1x128xf32, #tpu.memory_space<vmem>>, vector<1x128xf32>
    tpu.vector_store %arg8[%c0_17, %c0_18], %29 {strides = array<i32>} : memref<1x128xf32, #tpu.memory_space<vmem>>, vector<1x128xf32>,
    return
  }
  func.func @transform_0(%arg0: i32) -> (i32, i32) {
    %c0_i32 = arith.constant 0 : i32
    %c0_i32_0 = arith.constant 0 : i32
    return %c0_i32, %arg0 : i32, i32
  }
  func.func @transform_1(%arg0: i32) -> (i32, i32) {
    %c0_i32 = arith.constant 0 : i32
    %c0_i32_0 = arith.constant 0 : i32
    %c0_i32_1 = arith.constant 0 : i32
    return %c0_i32, %c0_i32_0 : i32, i32
  }
  func.func @transform_2(%arg0: i32) -> (i32, i32) {
    %c0_i32 = arith.constant 0 : i32
    %c0_i32_0 = arith.constant 0 : i32
    %c0_i32_1 = arith.constant 0 : i32
    return %c0_i32, %c0_i32_0 : i32, i32
  }
  func.func @transform_3(%arg0: i32) -> (i32, i32) {
    %c0_i32 = arith.constant 0 : i32
    %c0_i32_0 = arith.constant 0 : i32
    %c0_i32_1 = arith.constant 0 : i32
    return %c0_i32, %c0_i32_0 : i32, i32
  }
  func.func @transform_4(%arg0: i32) -> (i32, i32) {
    %c0_i32 = arith.constant 0 : i32
    %c0_i32_0 = arith.constant 0 : i32
    %c0_i32_1 = arith.constant 0 : i32
    return %c0_i32, %c0_i32_0 : i32, i32
  }
  func.func @transform_5(%arg0: i32) -> (i32, i32) {
    %c0_i32 = arith.constant 0 : i32
    %c0_i32_0 = arith.constant 0 : i32
    %c0_i32_1 = arith.constant 0 : i32
    return %c0_i32, %c0_i32_0 : i32, i32
  }
  func.func @transform_6(%arg0: i32) -> (i32, i32) {
    %c0_i32 = arith.constant 0 : i32
    %c0_i32_0 = arith.constant 0 : i32
    %c0_i32_1 = arith.constant 0 : i32
    return %c0_i32, %c0_i32_0 : i32, i32
  }
  func.func @transform_7(%arg0: i32) -> (i32, i32) {
    %c0_i32 = arith.constant 0 : i32
    %c0_i32_0 = arith.constant 0 : i32
    return %c0_i32, %arg0 : i32, i32
  }
}

</mosaic_0001>

<llo_original>
// kernel: tpu_custom_call.1
$region0: #{tpu_custom_call.1}
  #allocation0 [shape = 'u32[]', space=smem, size = 0x4, offset = 0x4, fixed_abs, tag = 'smem constant byte address 0x4 - core index']
  #allocation1 [shape = 'u32[144,128]{1,0:T(1,128)}', space=vmem, size = 0x12000, scoped, tag = 'internal scratch']
  %s0 = inlined_call_operand.vmem [shape: f32[2,256], index: 0, kind: input, shape index: {}]
  %s1 = inlined_call_operand.vmem [shape: f32[128,1], index: 1, kind: input, shape index: {}]
  %s2 = inlined_call_operand.vmem [shape: f32[128,1], index: 2, kind: input, shape index: {}]
  %s3 = inlined_call_operand.vmem [shape: bf16[128,128], index: 3, kind: input, shape index: {}]
  %s4 = inlined_call_operand.vmem [shape: f32[128,1], index: 4, kind: input, shape index: {}]
  %s5 = inlined_call_operand.vmem [shape: bf16[2,128], index: 5, kind: input, shape index: {}]
  %s6 = inlined_call_operand.vmem [shape: f32[2,1], index: 6, kind: input, shape index: {}]
  %s7 = inlined_call_operand.hbm [shape: f32[1,256], index: 7, kind: output, shape index: {}]
  %s8 = sld [smem:[#allocation0]]
  $region61: #{tpu_custom_call.1} parent=0
    _
  %s10 = ssub.s32 1, %s8
  %s11 = scalar_select 0, %s10, %s8
  $region1: #{tpu_custom_call.1} parent=0
    #allocation2 [shape = 'u8[1024]{0}', space=vmem, size = 0x400, scoped, tag = 'output window, operand 0']
    #allocation3 [shape = 's32[2]{0}', space=sflag, size = 0x8, scoped, tag = 'scoped memory for tpu_custom_call.1']
    %12 = vsyncpa [#allocation3], 0
    %s13 = scalar_lea.sflag [#allocation3], 1
    %14 = vsyncpa %s13, 0
    loop: start=0, step=1, limit=4
    $region2: #{tpu_custom_call.1} parent=1 // loop_pre_header
      _
    $region3: #{tpu_custom_call.1} parent=1 // loop_header
      %s16 = sphi 0, %s20
      %p17 = scmp.ge.s32.totalorder %s16, 4
      %s26 = sphi 0, %s28
      %s29 = sphi 0, %s26
      %s30 = sphi 0, %s29
      %s46 = sphi 0, %s30
      %s50 = sphi 0, %s50
      %s52 = sphi 0, %s50
      %s53 = sphi 0, %s52
      %s67 = sphi 0, %s53
      %s71 = sphi 0, %s71
      %s73 = sphi 0, %s71
      %s74 = sphi 0, %s73
      %s88 = sphi 0, %s74
      %s92 = sphi 0, %s92
      %s94 = sphi 0, %s92
      %s95 = sphi 0, %s94
      %s109 = sphi 0, %s95
      %s113 = sphi 0, %s113
      %s115 = sphi 0, %s113
      %s116 = sphi 0, %s115
      %s130 = sphi 0, %s116
      %s134 = sphi 0, %s134
      %s136 = sphi 0, %s134
      %s137 = sphi 0, %s136
      %s151 = sphi 0, %s137
      %s155 = sphi 0, %s155
      %s157 = sphi 0, %s155
      %s158 = sphi 0, %s157
      %s172 = sphi 0, %s158
      %s178 = sphi 0, %s180
      %s181 = sphi 0, %s178
      %s182 = sphi 0, %s181
      %s198 = sphi 0, %s182
    $region4: #{tpu_custom_call.1} parent=1 // loop_header_branch
      %19 = sbr.rel (%p17) target = $region8
    $region5: #{tpu_custom_call.1} parent=1 // loop_body
      %s21 = ssub.s32 %s16, 1
      %s22 = ssub.s32 %s16, 2
      %s23 = sadd.s32 %s16, 1
      %s24 = ssub.s32 %s16, %s23
      %p25 = scmp.eq.s32.totalorder %s24, 0
      %s27 = sadd.s32 %s26, 1
      %s28 = scalar_select %p25, %s26, %s27
      %p31 = pneg %p25
      %p32 = scmp.eq.s32.totalorder %s16, 1
      %p33 = por %p31, %p32
      %p34 = scmp.ne.s32.totalorder %s26, %s29
      %p35 = scmp.eq.s32.totalorder %s16, 0
      %p36 = por %p34, %p35
      %p37 = scmp.ne.s32.totalorder %s26, %s29
      %p38 = scmp.eq.s32.totalorder %s21, 1
      %p39 = por %p37, %p38
      %p40 = scmp.ne.s32.totalorder %s29, %s30
      %p41 = scmp.eq.s32.totalorder %s21, 0
      %p42 = por %p40, %p41
      %p43 = scmp.ne.s32.totalorder %s29, %s30
      %p44 = scmp.eq.s32.totalorder %s22, 1
      %p45 = por %p43, %p44
      %p47 = scmp.ne.s32.totalorder %s30, %s46
      %p48 = scmp.eq.s32.totalorder %s22, 0
      %p49 = por %p47, %p48
      %s51 = sadd.s32 %s50, 1
      %p54 = scmp.eq.s32.totalorder %s16, 1
      %p55 = scmp.ne.s32.totalorder %s50, %s52
      %p56 = scmp.eq.s32.totalorder %s16, 0
      %p57 = por %p55, %p56
      %p58 = scmp.ne.s32.totalorder %s50, %s52
      %p59 = scmp.eq.s32.totalorder %s21, 1
      %p60 = por %p58, %p59
      %p61 = scmp.ne.s32.totalorder %s52, %s53
      %p62 = scmp.eq.s32.totalorder %s21, 0
      %p63 = por %p61, %p62
      %p64 = scmp.ne.s32.totalorder %s52, %s53
      %p65 = scmp.eq.s32.totalorder %s22, 1
      %p66 = por %p64, %p65
      %p68 = scmp.ne.s32.totalorder %s53, %s67
      %p69 = scmp.eq.s32.totalorder %s22, 0
      %p70 = por %p68, %p69
      %s72 = sadd.s32 %s71, 1
      %p75 = scmp.eq.s32.totalorder %s16, 1
      %p76 = scmp.ne.s32.totalorder %s71, %s73
      %p77 = scmp.eq.s32.totalorder %s16, 0
      %p78 = por %p76, %p77
      %p79 = scmp.ne.s32.totalorder %s71, %s73
      %p80 = scmp.eq.s32.totalorder %s21, 1
      %p81 = por %p79, %p80
      %p82 = scmp.ne.s32.totalorder %s73, %s74
      %p83 = scmp.eq.s32.totalorder %s21, 0
      %p84 = por %p82, %p83
      %p85 = scmp.ne.s32.totalorder %s73, %s74
      %p86 = scmp.eq.s32.totalorder %s22, 1
      %p87 = por %p85, %p86
      %p89 = scmp.ne.s32.totalorder %s74, %s88
      %p90 = scmp.eq.s32.totalorder %s22, 0
      %p91 = por %p89, %p90
      %s93 = sadd.s32 %s92, 1
      %p96 = scmp.eq.s32.totalorder %s16, 1
      %p97 = scmp.ne.s32.totalorder %s92, %s94
      %p98 = scmp.eq.s32.totalorder %s16, 0
      %p99 = por %p97, %p98
      %p100 = scmp.ne.s32.totalorder %s92, %s94
      %p101 = scmp.eq.s32.totalorder %s21, 1
      %p102 = por %p100, %p101
      %p103 = scmp.ne.s32.totalorder %s94, %s95
      %p104 = scmp.eq.s32.totalorder %s21, 0
      %p105 = por %p103, %p104
      %p106 = scmp.ne.s32.totalorder %s94, %s95
      %p107 = scmp.eq.s32.totalorder %s22, 1
      %p108 = por %p106, %p107
      %p110 = scmp.ne.s32.totalorder %s95, %s109
      %p111 = scmp.eq.s32.totalorder %s22, 0
      %p112 = por %p110, %p111
      %s114 = sadd.s32 %s113, 1
      %p117 = scmp.eq.s32.totalorder %s16, 1
      %p118 = scmp.ne.s32.totalorder %s113, %s115
      %p119 = scmp.eq.s32.totalorder %s16, 0
      %p120 = por %p118, %p119
      %p121 = scmp.ne.s32.totalorder %s113, %s115
      %p122 = scmp.eq.s32.totalorder %s21, 1
      %p123 = por %p121, %p122
      %p124 = scmp.ne.s32.totalorder %s115, %s116
      %p125 = scmp.eq.s32.totalorder %s21, 0
      %p126 = por %p124, %p125
      %p127 = scmp.ne.s32.totalorder %s115, %s116
      %p128 = scmp.eq.s32.totalorder %s22, 1
      %p129 = por %p127, %p128
      %p131 = scmp.ne.s32.totalorder %s116, %s130
      %p132 = scmp.eq.s32.totalorder %s22, 0
      %p133 = por %p131, %p132
      %s135 = sadd.s32 %s134, 1
      %p138 = scmp.eq.s32.totalorder %s16, 1
      %p139 = scmp.ne.s32.totalorder %s134, %s136
      %p140 = scmp.eq.s32.totalorder %s16, 0
      %p141 = por %p139, %p140
      %p142 = scmp.ne.s32.totalorder %s134, %s136
      %p143 = scmp.eq.s32.totalorder %s21, 1
      %p144 = por %p142, %p143
      %p145 = scmp.ne.s32.totalorder %s136, %s137
      %p146 = scmp.eq.s32.totalorder %s21, 0
      %p147 = por %p145, %p146
      %p148 = scmp.ne.s32.totalorder %s136, %s137
      %p149 = scmp.eq.s32.totalorder %s22, 1
      %p150 = por %p148, %p149
      %p152 = scmp.ne.s32.totalorder %s137, %s151
      %p153 = scmp.eq.s32.totalorder %s22, 0
      %p154 = por %p152, %p153
      %s156 = sadd.s32 %s155, 1
      %p159 = scmp.eq.s32.totalorder %s16, 1
      %p160 = scmp.ne.s32.totalorder %s155, %s157
      %p161 = scmp.eq.s32.totalorder %s16, 0
      %p162 = por %p160, %p161
      %p163 = scmp.ne.s32.totalorder %s155, %s157
      %p164 = scmp.eq.s32.totalorder %s21, 1
      %p165 = por %p163, %p164
      %p166 = scmp.ne.s32.totalorder %s157, %s158
      %p167 = scmp.eq.s32.totalorder %s21, 0
      %p168 = por %p166, %p167
      %p169 = scmp.ne.s32.totalorder %s157, %s158
      %p170 = scmp.eq.s32.totalorder %s22, 1
      %p171 = por %p169, %p170
      %p173 = scmp.ne.s32.totalorder %s158, %s172
      %p174 = scmp.eq.s32.totalorder %s22, 0
      %p175 = por %p173, %p174
      %s176 = ssub.s32 %s16, %s23
      %p177 = scmp.eq.s32.totalorder %s176, 0
      %s179 = sadd.s32 %s178, 1
      %s180 = scalar_select %p177, %s178, %s179
      %p183 = pneg %p177
      %p184 = scmp.eq.s32.totalorder %s16, 1
      %p185 = por %p183, %p184
      %p186 = scmp.ne.s32.totalorder %s178, %s181
      %p187 = scmp.eq.s32.totalorder %s16, 0
      %p188 = por %p186, %p187
      %p189 = scmp.ne.s32.totalorder %s178, %s181
      %p190 = scmp.eq.s32.totalorder %s21, 1
      %p191 = por %p189, %p190
      %p192 = scmp.ne.s32.totalorder %s181, %s182
      %p193 = scmp.eq.s32.totalorder %s21, 0
      %p194 = por %p192, %p193
      %p195 = scmp.ne.s32.totalorder %s181, %s182
      %p196 = scmp.eq.s32.totalorder %s22, 1
      %p197 = por %p195, %p196
      %p199 = scmp.ne.s32.totalorder %s182, %s198
      %p200 = scmp.eq.s32.totalorder %s22, 0
      %p201 = por %p199, %p200
      %p202 = scmp.le.s32.totalorder 1, %s16
      %p203 = scmp.lt.s32.totalorder %s16, 3
      %p204 = pnand %p202, %p203
      %p205 = pneg %p204
      // Predicated region
      $region9: #{tpu_custom_call.1} parent=5 // pred_check
        _
      $region10: #{tpu_custom_call.1} parent=5 // pred_check_branch
        %207 = sbr.rel (%p204) target = $region12
      $region11: #{tpu_custom_call.1} parent=5 // pred_region
        %s208 = ssub.s32 %s16, 1
        // Predicated region
        $region13: #{tpu_custom_call.1} parent=11 // pred_check
          %p209 = pneg %p63
        $region14: #{tpu_custom_call.1} parent=11 // pred_check_branch
          %211 = sbr.rel (%p209) target = $region16
        $region15: #{tpu_custom_call.1} parent=11 // pred_region
          _
        $region16: #{tpu_custom_call.1} parent=11 // pred_fallthru
          _
        // Predicated region
        $region17: #{tpu_custom_call.1} parent=11 // pred_check
          %p212 = pneg %p84
        $region18: #{tpu_custom_call.1} parent=11 // pred_check_branch
          %214 = sbr.rel (%p212) target = $region20
        $region19: #{tpu_custom_call.1} parent=11 // pred_region
          _
        $region20: #{tpu_custom_call.1} parent=11 // pred_fallthru
          _
        // Predicated region
        $region21: #{tpu_custom_call.1} parent=11 // pred_check
          %p215 = pneg %p105
        $region22: #{tpu_custom_call.1} parent=11 // pred_check_branch
          %217 = sbr.rel (%p215) target = $region24
        $region23: #{tpu_custom_call.1} parent=11 // pred_region
          _
        $region24: #{tpu_custom_call.1} parent=11 // pred_fallthru
          _
        // Predicated region
        $region25: #{tpu_custom_call.1} parent=11 // pred_check
          %p218 = pneg %p126
        $region26: #{tpu_custom_call.1} parent=11 // pred_check_branch
          %220 = sbr.rel (%p218) target = $region28
        $region27: #{tpu_custom_call.1} parent=11 // pred_region
          _
        $region28: #{tpu_custom_call.1} parent=11 // pred_fallthru
          _
        // Predicated region
        $region29: #{tpu_custom_call.1} parent=11 // pred_check
          %p221 = pneg %p147
        $region30: #{tpu_custom_call.1} parent=11 // pred_check_branch
          %223 = sbr.rel (%p221) target = $region32
        $region31: #{tpu_custom_call.1} parent=11 // pred_region
          _
        $region32: #{tpu_custom_call.1} parent=11 // pred_fallthru
          _
        // Predicated region
        $region33: #{tpu_custom_call.1} parent=11 // pred_check
          %p224 = pneg %p168
        $region34: #{tpu_custom_call.1} parent=11 // pred_check_branch
          %226 = sbr.rel (%p224) target = $region36
        $region35: #{tpu_custom_call.1} parent=11 // pred_region
          _
        $region36: #{tpu_custom_call.1} parent=11 // pred_fallthru
          _
      $region12: #{tpu_custom_call.1} parent=5 // pred_fallthru
        _
      %p227 = scmp.lt.s32.totalorder %s16, 2
      // Predicated region
      $region37: #{tpu_custom_call.1} parent=5 // pred_check
        %p228 = pneg %p227
      $region38: #{tpu_custom_call.1} parent=5 // pred_check_branch
        %230 = sbr.rel (%p228) target = $region40
      $region39: #{tpu_custom_call.1} parent=5 // pred_region
        // Predicated region
        $region41: #{tpu_custom_call.1} parent=39 // pred_check
          %p231 = pneg %p36
        $region42: #{tpu_custom_call.1} parent=39 // pred_check_branch
          %233 = sbr.rel (%p231) target = $region44
        $region43: #{tpu_custom_call.1} parent=39 // pred_region
          %p234 = scmp.lt.s32.totalorder %s16, 1
          %s235 = scalar_select %p234, %s16, 1
          %s236 = smul.addr %s235, 2
          %s237 = scalar_lea.vmem %s0, %s236
        $region44: #{tpu_custom_call.1} parent=39 // pred_fallthru
          _
      $region40: #{tpu_custom_call.1} parent=5 // pred_fallthru
        _
      %p238 = scmp.le.s32.totalorder 1, %s16
      %p239 = scmp.lt.s32.totalorder %s16, 3
      %p240 = pnand %p238, %p239
      %p241 = pneg %p240
      // Predicated region
      $region45: #{tpu_custom_call.1} parent=5 // pred_check
        _
      $region46: #{tpu_custom_call.1} parent=5 // pred_check_branch
        %243 = sbr.rel (%p240) target = $region48
      $region47: #{tpu_custom_call.1} parent=5 // pred_region
        %s244 = ssub.s32 %s16, 1
        %p245 = scmp.lt.s32.totalorder %s21, 1
        %s246 = scalar_select %p245, %s21, 1
        %s247 = smul.addr %s246, 2
        %s248 = scalar_lea.vmem %s0, %s247
        %p249 = pneg %p42
        %p250 = pneg %p39
        %p251 = pneg %p63
        %p252 = pneg %p60
        %p253 = pneg %p84
        %p254 = pneg %p81
        %p255 = pneg %p105
        %p256 = pneg %p102
        %p257 = pneg %p126
        %p258 = pneg %p123
        %p259 = pneg %p147
        %p260 = pneg %p144
        %p261 = pneg %p168
        %p262 = pneg %p165
        %p263 = pneg %p194
        %p264 = pneg %p191
        %s265 = sand.u32 %s181, 1
        %s266 = scalar_lea.sflag [#allocation3], %s265
        %s267 = sand.u32 %s181, 1
        %s268 = scalar_lea.vmem [#allocation2], %s267
        %p269 = scmp.lt.s32.totalorder %s21, 1
        %s270 = scalar_select %p269, %s21, 1
        %s271 = smul.addr %s270, 2
        %s272 = scalar_lea.vmem %s0, %s271
        %v274 = vld [vmem:[%s272] sm:$0x1]
        %v275 = vld [vmem:[%s272 + $0x1] sm:$0x1]
        %v276 = vld [vmem:[%s1] sm:$0xff]
        %v277 = vld [vmem:[%s1 + $0x8] sm:$0xff]
        %v278 = vld [vmem:[%s1 + $0x10] sm:$0xff]
        %v279 = vld [vmem:[%s1 + $0x18] sm:$0xff]
        %v280 = vld [vmem:[%s1 + $0x20] sm:$0xff]
        %v281 = vld [vmem:[%s1 + $0x28] sm:$0xff]
        %v282 = vld [vmem:[%s1 + $0x30] sm:$0xff]
        %v283 = vld [vmem:[%s1 + $0x38] sm:$0xff]
        %v284 = vld [vmem:[%s1 + $0x40] sm:$0xff]
        %v285 = vld [vmem:[%s1 + $0x48] sm:$0xff]
        %v286 = vld [vmem:[%s1 + $0x50] sm:$0xff]
        %v287 = vld [vmem:[%s1 + $0x58] sm:$0xff]
        %v288 = vld [vmem:[%s1 + $0x60] sm:$0xff]
        %v289 = vld [vmem:[%s1 + $0x68] sm:$0xff]
        %v290 = vld [vmem:[%s1 + $0x70] sm:$0xff]
        %v291 = vld [vmem:[%s1 + $0x78] sm:$0xff]
        %293 = vset.pattern.permute.xlu0 0
        %294 = vperm.xlu0 %293, %v276
        %v295 = vpop.permute.xlu0 %294
        %298 = vset.pattern.permute.xlu0 0
        %299 = vperm.xlu0 %298, %v277
        %v300 = vpop.permute.xlu0 %299
        %303 = vset.pattern.permute.xlu0 0
        %304 = vperm.xlu0 %303, %v278
        %v305 = vpop.permute.xlu0 %304
        %308 = vset.pattern.permute.xlu0 0
        %309 = vperm.xlu0 %308, %v279
        %v310 = vpop.permute.xlu0 %309
        %313 = vset.pattern.permute.xlu0 0
        %314 = vperm.xlu0 %313, %v280
        %v315 = vpop.permute.xlu0 %314
        %318 = vset.pattern.permute.xlu0 0
        %319 = vperm.xlu0 %318, %v281
        %v320 = vpop.permute.xlu0 %319
        %323 = vset.pattern.permute.xlu0 0
        %324 = vperm.xlu0 %323, %v282
        %v325 = vpop.permute.xlu0 %324
        %328 = vset.pattern.permute.xlu0 0
        %329 = vperm.xlu0 %328, %v283
        %v330 = vpop.permute.xlu0 %329
        %333 = vset.pattern.permute.xlu0 0
        %334 = vperm.xlu0 %333, %v284
        %v335 = vpop.permute.xlu0 %334
        %338 = vset.pattern.permute.xlu0 0
        %339 = vperm.xlu0 %338, %v285
        %v340 = vpop.permute.xlu0 %339
        %343 = vset.pattern.permute.xlu0 0
        %344 = vperm.xlu0 %343, %v286
        %v345 = vpop.permute.xlu0 %344
        %348 = vset.pattern.permute.xlu0 0
        %349 = vperm.xlu0 %348, %v287
        %v350 = vpop.permute.xlu0 %349
        %353 = vset.pattern.permute.xlu0 0
        %354 = vperm.xlu0 %353, %v288
        %v355 = vpop.permute.xlu0 %354
        %358 = vset.pattern.permute.xlu0 0
        %359 = vperm.xlu0 %358, %v289
        %v360 = vpop.permute.xlu0 %359
        %363 = vset.pattern.permute.xlu0 0
        %364 = vperm.xlu0 %363, %v290
        %v365 = vpop.permute.xlu0 %364
        %368 = vset.pattern.permute.xlu0 0
        %369 = vperm.xlu0 %368, %v291
        %v370 = vpop.permute.xlu0 %369
        %v372 = vlaneseq
        %v373 = vshrl.u32 %v372, 7
        %v374 = vsub.s32 0, %v373
        %v375 = vrot.slane %v274, %v374
        %v376 = vmul.f32 %v295, %v375
        %v377 = vmul.f32 %v300, %v375
        %v378 = vmul.f32 %v305, %v375
        %v379 = vmul.f32 %v310, %v375
        %v380 = vmul.f32 %v315, %v375
        %v381 = vmul.f32 %v320, %v375
        %v382 = vmul.f32 %v325, %v375
        %v383 = vmul.f32 %v330, %v375
        %v384 = vmul.f32 %v335, %v375
        %v385 = vmul.f32 %v340, %v375
        %v386 = vmul.f32 %v345, %v375
        %v387 = vmul.f32 %v350, %v375
        %v388 = vmul.f32 %v355, %v375
        %v389 = vmul.f32 %v360, %v375
        %v390 = vmul.f32 %v365, %v375
        %v391 = vmul.f32 %v370, %v375
        %v392 = vld [vmem:[%s2] sm:$0xff]
        %v393 = vld [vmem:[%s2 + $0x8] sm:$0xff]
        %v394 = vld [vmem:[%s2 + $0x10] sm:$0xff]
        %v395 = vld [vmem:[%s2 + $0x18] sm:$0xff]
        %v396 = vld [vmem:[%s2 + $0x20] sm:$0xff]
        %v397 = vld [vmem:[%s2 + $0x28] sm:$0xff]
        %v398 = vld [vmem:[%s2 + $0x30] sm:$0xff]
        %v399 = vld [vmem:[%s2 + $0x38] sm:$0xff]
        %v400 = vld [vmem:[%s2 + $0x40] sm:$0xff]
        %v401 = vld [vmem:[%s2 + $0x48] sm:$0xff]
        %v402 = vld [vmem:[%s2 + $0x50] sm:$0xff]
        %v403 = vld [vmem:[%s2 + $0x58] sm:$0xff]
        %v404 = vld [vmem:[%s2 + $0x60] sm:$0xff]
        %v405 = vld [vmem:[%s2 + $0x68] sm:$0xff]
        %v406 = vld [vmem:[%s2 + $0x70] sm:$0xff]
        %v407 = vld [vmem:[%s2 + $0x78] sm:$0xff]
        %409 = vset.pattern.permute.xlu0 0
        %410 = vperm.xlu0 %409, %v392
        %v411 = vpop.permute.xlu0 %410
        %414 = vset.pattern.permute.xlu0 0
        %415 = vperm.xlu0 %414, %v393
        %v416 = vpop.permute.xlu0 %415
        %419 = vset.pattern.permute.xlu0 0
        %420 = vperm.xlu0 %419, %v394
        %v421 = vpop.permute.xlu0 %420
        %424 = vset.pattern.permute.xlu0 0
        %425 = vperm.xlu0 %424, %v395
        %v426 = vpop.permute.xlu0 %425
        %429 = vset.pattern.permute.xlu0 0
        %430 = vperm.xlu0 %429, %v396
        %v431 = vpop.permute.xlu0 %430
        %434 = vset.pattern.permute.xlu0 0
        %435 = vperm.xlu0 %434, %v397
        %v436 = vpop.permute.xlu0 %435
        %439 = vset.pattern.permute.xlu0 0
        %440 = vperm.xlu0 %439, %v398
        %v441 = vpop.permute.xlu0 %440
        %444 = vset.pattern.permute.xlu0 0
        %445 = vperm.xlu0 %444, %v399
        %v446 = vpop.permute.xlu0 %445
        %449 = vset.pattern.permute.xlu0 0
        %450 = vperm.xlu0 %449, %v400
        %v451 = vpop.permute.xlu0 %450
        %454 = vset.pattern.permute.xlu0 0
        %455 = vperm.xlu0 %454, %v401
        %v456 = vpop.permute.xlu0 %455
        %459 = vset.pattern.permute.xlu0 0
        %460 = vperm.xlu0 %459, %v402
        %v461 = vpop.permute.xlu0 %460
        %464 = vset.pattern.permute.xlu0 0
        %465 = vperm.xlu0 %464, %v403
        %v466 = vpop.permute.xlu0 %465
        %469 = vset.pattern.permute.xlu0 0
        %470 = vperm.xlu0 %469, %v404
        %v471 = vpop.permute.xlu0 %470
        %474 = vset.pattern.permute.xlu0 0
        %475 = vperm.xlu0 %474, %v405
        %v476 = vpop.permute.xlu0 %475
        %479 = vset.pattern.permute.xlu0 0
        %480 = vperm.xlu0 %479, %v406
        %v481 = vpop.permute.xlu0 %480
        %484 = vset.pattern.permute.xlu0 0
        %485 = vperm.xlu0 %484, %v407
        %v486 = vpop.permute.xlu0 %485
        %v488 = vadd.f32 %v376, %v411
        %v489 = vadd.f32 %v377, %v416
        %v490 = vadd.f32 %v378, %v421
        %v491 = vadd.f32 %v379, %v426
        %v492 = vadd.f32 %v380, %v431
        %v493 = vadd.f32 %v381, %v436
        %v494 = vadd.f32 %v382, %v441
        %v495 = vadd.f32 %v383, %v446
        %v496 = vadd.f32 %v384, %v451
        %v497 = vadd.f32 %v385, %v456
        %v498 = vadd.f32 %v386, %v461
        %v499 = vadd.f32 %v387, %v466
        %v500 = vadd.f32 %v388, %v471
        %v501 = vadd.f32 %v389, %v476
        %v502 = vadd.f32 %v390, %v481
        %v503 = vadd.f32 %v391, %v486
        %v504 = vmax.f32 %v488, 0.0
        %v505 = vmax.f32 %v489, 0.0
        %v506 = vmax.f32 %v490, 0.0
        %v507 = vmax.f32 %v491, 0.0
        %v508 = vmax.f32 %v492, 0.0
        %v509 = vmax.f32 %v493, 0.0
        %v510 = vmax.f32 %v494, 0.0
        %v511 = vmax.f32 %v495, 0.0
        %v512 = vmax.f32 %v496, 0.0
        %v513 = vmax.f32 %v497, 0.0
        %v514 = vmax.f32 %v498, 0.0
        %v515 = vmax.f32 %v499, 0.0
        %v516 = vmax.f32 %v500, 0.0
        %v517 = vmax.f32 %v501, 0.0
        %v518 = vmax.f32 %v502, 0.0
        %v519 = vmax.f32 %v503, 0.0
        %v520 = vld [vmem:[%s3] sm:$0xf]
        %v521 = vld [vmem:[%s3 + $0x4] sm:$0xf]
        %v522 = vld [vmem:[%s3 + $0x8] sm:$0xf]
        %v523 = vld [vmem:[%s3 + $0xc] sm:$0xf]
        %v524 = vld [vmem:[%s3 + $0x10] sm:$0xf]
        %v525 = vld [vmem:[%s3 + $0x14] sm:$0xf]
        %v526 = vld [vmem:[%s3 + $0x18] sm:$0xf]
        %v527 = vld [vmem:[%s3 + $0x1c] sm:$0xf]
        %v528 = vld [vmem:[%s3 + $0x20] sm:$0xf]
        %v529 = vld [vmem:[%s3 + $0x24] sm:$0xf]
        %v530 = vld [vmem:[%s3 + $0x28] sm:$0xf]
        %v531 = vld [vmem:[%s3 + $0x2c] sm:$0xf]
        %v532 = vld [vmem:[%s3 + $0x30] sm:$0xf]
        %v533 = vld [vmem:[%s3 + $0x34] sm:$0xf]
        %v534 = vld [vmem:[%s3 + $0x38] sm:$0xf]
        %v535 = vld [vmem:[%s3 + $0x3c] sm:$0xf]
        %v536 = vpack.c.bf16 %v505, %v504
        %v537 = vpack.c.bf16 %v507, %v506
        %v538 = vpack.c.bf16 %v509, %v508
        %v539 = vpack.c.bf16 %v511, %v510
        %v540 = vpack.c.bf16 %v513, %v512
        %v541 = vpack.c.bf16 %v515, %v514
        %v542 = vpack.c.bf16 %v517, %v516
        %v543 = vpack.c.bf16 %v519, %v518
        %v544 = vld [vmem:[%s4] sm:$0xff]
        %v545 = vld [vmem:[%s4 + $0x8] sm:$0xff]
        %v546 = vld [vmem:[%s4 + $0x10] sm:$0xff]
        %v547 = vld [vmem:[%s4 + $0x18] sm:$0xff]
        %v548 = vld [vmem:[%s4 + $0x20] sm:$0xff]
        %v549 = vld [vmem:[%s4 + $0x28] sm:$0xff]
        %v550 = vld [vmem:[%s4 + $0x30] sm:$0xff]
        %v551 = vld [vmem:[%s4 + $0x38] sm:$0xff]
        %v552 = vld [vmem:[%s4 + $0x40] sm:$0xff]
        %v553 = vld [vmem:[%s4 + $0x48] sm:$0xff]
        %v554 = vld [vmem:[%s4 + $0x50] sm:$0xff]
        %v555 = vld [vmem:[%s4 + $0x58] sm:$0xff]
        %v556 = vld [vmem:[%s4 + $0x60] sm:$0xff]
        %v557 = vld [vmem:[%s4 + $0x68] sm:$0xff]
        %v558 = vld [vmem:[%s4 + $0x70] sm:$0xff]
        %v559 = vld [vmem:[%s4 + $0x78] sm:$0xff]
        %561 = vset.pattern.permute.xlu0 0
        %562 = vperm.xlu0 %561, %v544
        %v563 = vpop.permute.xlu0 %562
        %566 = vset.pattern.permute.xlu0 0
        %567 = vperm.xlu0 %566, %v545
        %v568 = vpop.permute.xlu0 %567
        %571 = vset.pattern.permute.xlu0 0
        %572 = vperm.xlu0 %571, %v546
        %v573 = vpop.permute.xlu0 %572
        %576 = vset.pattern.permute.xlu0 0
        %577 = vperm.xlu0 %576, %v547
        %v578 = vpop.permute.xlu0 %577
        %581 = vset.pattern.permute.xlu0 0
        %582 = vperm.xlu0 %581, %v548
        %v583 = vpop.permute.xlu0 %582
        %586 = vset.pattern.permute.xlu0 0
        %587 = vperm.xlu0 %586, %v549
        %v588 = vpop.permute.xlu0 %587
        %591 = vset.pattern.permute.xlu0 0
        %592 = vperm.xlu0 %591, %v550
        %v593 = vpop.permute.xlu0 %592
        %596 = vset.pattern.permute.xlu0 0
        %597 = vperm.xlu0 %596, %v551
        %v598 = vpop.permute.xlu0 %597
        %601 = vset.pattern.permute.xlu0 0
        %602 = vperm.xlu0 %601, %v552
        %v603 = vpop.permute.xlu0 %602
        %606 = vset.pattern.permute.xlu0 0
        %607 = vperm.xlu0 %606, %v553
        %v608 = vpop.permute.xlu0 %607
        %611 = vset.pattern.permute.xlu0 0
        %612 = vperm.xlu0 %611, %v554
        %v613 = vpop.permute.xlu0 %612
        %616 = vset.pattern.permute.xlu0 0
        %617 = vperm.xlu0 %616, %v555
        %v618 = vpop.permute.xlu0 %617
        %621 = vset.pattern.permute.xlu0 0
        %622 = vperm.xlu0 %621, %v556
        %v623 = vpop.permute.xlu0 %622
        %626 = vset.pattern.permute.xlu0 0
        %627 = vperm.xlu0 %626, %v557
        %v628 = vpop.permute.xlu0 %627
        %631 = vset.pattern.permute.xlu0 0
        %632 = vperm.xlu0 %631, %v558
        %v633 = vpop.permute.xlu0 %632
        %636 = vset.pattern.permute.xlu0 0
        %637 = vperm.xlu0 %636, %v559
        %v638 = vpop.permute.xlu0 %637
        %v656 = vunpack.c.l.b16 %v520
        %v657 = vunpack.c.l.b16 %v521
        %v658 = vunpack.c.l.b16 %v522
        %v659 = vunpack.c.l.b16 %v523
        %v660 = vunpack.c.l.b16 %v524
        %v661 = vunpack.c.l.b16 %v525
        %v662 = vunpack.c.l.b16 %v526
        %v663 = vunpack.c.l.b16 %v527
        %v664 = vunpack.c.l.b16 %v528
        %v665 = vunpack.c.l.b16 %v529
        %v666 = vunpack.c.l.b16 %v530
        %v667 = vunpack.c.l.b16 %v531
        %v668 = vunpack.c.l.b16 %v532
        %v669 = vunpack.c.l.b16 %v533
        %v670 = vunpack.c.l.b16 %v534
        %v671 = vunpack.c.l.b16 %v535
        %v672 = vpack.c.b16 %v657, %v656
        %v673 = vpack.c.b16 %v659, %v658
        %v674 = vpack.c.b16 %v661, %v660
        %v675 = vpack.c.b16 %v663, %v662
        %v676 = vpack.c.b16 %v665, %v664
        %v677 = vpack.c.b16 %v667, %v666
        %v678 = vpack.c.b16 %v669, %v668
        %v679 = vpack.c.b16 %v671, %v670
        %688 = vmatprep.subr.bf16.mxu0 0
        %689 = vmatpush1.bf16.msra.mxu0 %v536
        %690 = vmatprep.subr.bf16.mxu0 0
        %691 = vmatpush1.bf16.msra.mxu0 %v537
        %692 = vmatprep.subr.bf16.mxu0 0
        %693 = vmatpush1.bf16.msra.mxu0 %v538
        %694 = vmatprep.subr.bf16.mxu0 0
        %695 = vmatpush1.bf16.msra.mxu0 %v539
        %696 = vmatprep.subr.bf16.mxu0 0
        %697 = vmatpush1.bf16.msra.mxu0 %v540
        %698 = vmatprep.subr.bf16.mxu0 0
        %699 = vmatpush1.bf16.msra.mxu0 %v541
        %700 = vmatprep.subr.bf16.mxu0 0
        %701 = vmatpush1.bf16.msra.mxu0 %v542
        %702 = vmatprep.subr.bf16.mxu0 0
        %703 = vmatpush1.bf16.msra.mxu0 %v543
        %704 = vmatprep.subr.bf16.mxu0 0
        %705 = vmatpush1.bf16.msra.mxu0 0
        %706 = vmatprep.subr.bf16.mxu0 0
        %707 = vmatpush1.bf16.msra.mxu0 0
        %708 = vmatprep.subr.bf16.mxu0 0
        %709 = vmatpush1.bf16.msra.mxu0 0
        %710 = vmatprep.subr.bf16.mxu0 0
        %711 = vmatpush1.bf16.msra.mxu0 0
        %712 = vmatprep.subr.bf16.mxu0 0
        %713 = vmatpush1.bf16.msra.mxu0 0
        %714 = vmatprep.subr.bf16.mxu0 0
        %715 = vmatpush1.bf16.msra.mxu0 0
        %716 = vmatprep.subr.bf16.mxu0 0
        %717 = vmatpush1.bf16.msra.mxu0 0
        %718 = vmatprep.subr.bf16.mxu0 0
        %719 = vmatpush1.bf16.msra.mxu0 0
        %720 = vmatprep.mubr.bf16.mxu0 0
        %721 = vmatmul.mubr.bf16.gmra.mrb[0].mxu0 %v672
        %v722 = vpop.f32.mrb[0].mxu0
        %v723 = vadd.f32 %v563, %v722
        %v724 = vpop.f32.mrb[0].mxu0
        %v725 = vpop.f32.mrb[0].mxu0
        %v726 = vadd.f32 %v568, %v725
        %v727 = vpop.f32.mrb[0].mxu0
        %728 = vmatprep.mubr.bf16.mxu0 0
        %729 = vmatmul.mubr.bf16.gmra.mrb[0].mxu0 %v673
        %v730 = vpop.f32.mrb[0].mxu0
        %v731 = vadd.f32 %v573, %v730
        %v732 = vpop.f32.mrb[0].mxu0
        %v733 = vpop.f32.mrb[0].mxu0
        %v734 = vadd.f32 %v578, %v733
        %v735 = vpop.f32.mrb[0].mxu0
        %736 = vmatprep.mubr.bf16.mxu0 0
        %737 = vmatmul.mubr.bf16.gmra.mrb[0].mxu0 %v674
        %v738 = vpop.f32.mrb[0].mxu0
        %v739 = vadd.f32 %v583, %v738
        %v740 = vpop.f32.mrb[0].mxu0
        %v741 = vpop.f32.mrb[0].mxu0
        %v742 = vadd.f32 %v588, %v741
        %v743 = vpop.f32.mrb[0].mxu0
        %744 = vmatprep.mubr.bf16.mxu0 0
        %745 = vmatmul.mubr.bf16.gmra.mrb[0].mxu0 %v675
        %v746 = vpop.f32.mrb[0].mxu0
        %v747 = vadd.f32 %v593, %v746
        %v748 = vpop.f32.mrb[0].mxu0
        %v749 = vpop.f32.mrb[0].mxu0
        %v750 = vadd.f32 %v598, %v749
        %v751 = vpop.f32.mrb[0].mxu0
        %752 = vmatprep.mubr.bf16.mxu0 0
        %753 = vmatmul.mubr.bf16.gmra.mrb[0].mxu0 %v676
        %v754 = vpop.f32.mrb[0].mxu0
        %v755 = vadd.f32 %v603, %v754
        %v756 = vpop.f32.mrb[0].mxu0
        %v757 = vpop.f32.mrb[0].mxu0
        %v758 = vadd.f32 %v608, %v757
        %v759 = vpop.f32.mrb[0].mxu0
        %760 = vmatprep.mubr.bf16.mxu0 0
        %761 = vmatmul.mubr.bf16.gmra.mrb[0].mxu0 %v677
        %v762 = vpop.f32.mrb[0].mxu0
        %v763 = vadd.f32 %v613, %v762
        %v764 = vpop.f32.mrb[0].mxu0
        %v765 = vpop.f32.mrb[0].mxu0
        %v766 = vadd.f32 %v618, %v765
        %v767 = vpop.f32.mrb[0].mxu0
        %768 = vmatprep.mubr.bf16.mxu0 0
        %769 = vmatmul.mubr.bf16.gmra.mrb[0].mxu0 %v678
        %v770 = vpop.f32.mrb[0].mxu0
        %v771 = vadd.f32 %v623, %v770
        %v772 = vpop.f32.mrb[0].mxu0
        %v773 = vpop.f32.mrb[0].mxu0
        %v774 = vadd.f32 %v628, %v773
        %v775 = vpop.f32.mrb[0].mxu0
        %776 = vmatprep.mubr.bf16.mxu0 0
        %777 = vmatmul.mubr.bf16.gmra.mrb[0].mxu0 %v679
        %v778 = vpop.f32.mrb[0].mxu0
        %v779 = vadd.f32 %v633, %v778
        %v780 = vpop.f32.mrb[0].mxu0
        %v781 = vpop.f32.mrb[0].mxu0
        %v782 = vadd.f32 %v638, %v781
        %v783 = vpop.f32.mrb[0].mxu0
        %784 = vdwg.mxu0
        %v785 = vmax.f32 %v723, 0.0
        %v786 = vmax.f32 %v726, 0.0
        %v787 = vmax.f32 %v731, 0.0
        %v788 = vmax.f32 %v734, 0.0
        %v789 = vmax.f32 %v739, 0.0
        %v790 = vmax.f32 %v742, 0.0
        %v791 = vmax.f32 %v747, 0.0
        %v792 = vmax.f32 %v750, 0.0
        %v793 = vmax.f32 %v755, 0.0
        %v794 = vmax.f32 %v758, 0.0
        %v795 = vmax.f32 %v763, 0.0
        %v796 = vmax.f32 %v766, 0.0
        %v797 = vmax.f32 %v771, 0.0
        %v798 = vmax.f32 %v774, 0.0
        %v799 = vmax.f32 %v779, 0.0
        %v800 = vmax.f32 %v782, 0.0
        %v801 = vld [vmem:[%s5] sm:$0x1]
        %v802 = vpack.c.bf16 %v786, %v785
        %v803 = vpack.c.bf16 %v788, %v787
        %v804 = vpack.c.bf16 %v790, %v789
        %v805 = vpack.c.bf16 %v792, %v791
        %v806 = vpack.c.bf16 %v794, %v793
        %v807 = vpack.c.bf16 %v796, %v795
        %v808 = vpack.c.bf16 %v798, %v797
        %v809 = vpack.c.bf16 %v800, %v799
        %v810 = vld [vmem:[%s6] sm:$0x3]
        %812 = vset.pattern.permute.xlu0 0
        %813 = vperm.xlu0 %812, %v810
        %v814 = vpop.permute.xlu0 %813
        %816 = vmatprep.subr.bf16.mxu0 0
        %817 = vmatpush1.bf16.msra.mxu0 %v802
        %818 = vmatprep.subr.bf16.mxu0 0
        %819 = vmatpush1.bf16.msra.mxu0 %v803
        %820 = vmatprep.subr.bf16.mxu0 0
        %821 = vmatpush1.bf16.msra.mxu0 %v804
        %822 = vmatprep.subr.bf16.mxu0 0
        %823 = vmatpush1.bf16.msra.mxu0 %v805
        %824 = vmatprep.subr.bf16.mxu0 0
        %825 = vmatpush1.bf16.msra.mxu0 %v806
        %826 = vmatprep.subr.bf16.mxu0 0
        %827 = vmatpush1.bf16.msra.mxu0 %v807
        %828 = vmatprep.subr.bf16.mxu0 0
        %829 = vmatpush1.bf16.msra.mxu0 %v808
        %830 = vmatprep.subr.bf16.mxu0 0
        %831 = vmatpush1.bf16.msra.mxu0 %v809
        %832 = vmatprep.subr.bf16.mxu0 0
        %833 = vmatpush1.bf16.msra.mxu0 0
        %834 = vmatprep.subr.bf16.mxu0 0
        %835 = vmatpush1.bf16.msra.mxu0 0
        %836 = vmatprep.subr.bf16.mxu0 0
        %837 = vmatpush1.bf16.msra.mxu0 0
        %838 = vmatprep.subr.bf16.mxu0 0
        %839 = vmatpush1.bf16.msra.mxu0 0
        %840 = vmatprep.subr.bf16.mxu0 0
        %841 = vmatpush1.bf16.msra.mxu0 0
        %842 = vmatprep.subr.bf16.mxu0 0
        %843 = vmatpush1.bf16.msra.mxu0 0
        %844 = vmatprep.subr.bf16.mxu0 0
        %845 = vmatpush1.bf16.msra.mxu0 0
        %846 = vmatprep.subr.bf16.mxu0 0
        %847 = vmatpush1.bf16.msra.mxu0 0
        %848 = vmatprep.mubr.bf16.mxu0 0
        %849 = vmatmul.mubr.bf16.gmra.mrb[0].mxu0 %v801
        %v850 = vpop.f32.mrb[0].mxu0
        %v851 = vadd.f32 %v814, %v850
        %v852 = vpop.f32.mrb[0].mxu0
        %v853 = vpop.f32.mrb[0].mxu0
        %v854 = vpop.f32.mrb[0].mxu0
        %855 = vdwg.mxu0
        %v856 = vmul.f32 %v851, 1.442695
        %v857 = vpow.pop %v856
        %v859 = vrot.slane %v275, 7
        %v861 = vmul.f32 %v857, %v859
        %v863 = vrot.slane %v861, 1
        %v865 = vadd.f32 %v851, %v863
        %866 = vst [vmem:[%s268] sm:$0x1] %v865
        %s867 = sand.u32 %s181, 1
        %s868 = scalar_lea.sflag [#allocation3], %s867
        %s869 = sand.u32 %s181, 1
        %s870 = scalar_lea.vmem [#allocation2], %s869
        // Predicated region
        $region49: #{tpu_custom_call.1} parent=47 // pred_check
          %p871 = pneg %p191
        $region50: #{tpu_custom_call.1} parent=47 // pred_check_branch
          %873 = sbr.rel (%p871) target = $region52
        $region51: #{tpu_custom_call.1} parent=47 // pred_region
          %s875 = ssub.s32 16, 16
          %876 = vsyncadd %s868, %s875
          %s877 = smul.addr %s21, 16
          %s878 = scalar_lea.hbm %s7, %s877
          %s880 = sshll.u32 %s870, 4
          %s881 = int_to_ptr.vmem [resolvable:$true] %s880
          %883 = dma.vmem_to_hbm [thread:$0]  %s881, 16, %s878, %s868
        $region52: #{tpu_custom_call.1} parent=47 // pred_fallthru
          _
      $region48: #{tpu_custom_call.1} parent=5 // pred_fallthru
        _
      %p884 = scmp.le.s32.totalorder 2, %s16
      // Predicated region
      $region53: #{tpu_custom_call.1} parent=5 // pred_check
        %p885 = pneg %p884
      $region54: #{tpu_custom_call.1} parent=5 // pred_check_branch
        %887 = sbr.rel (%p885) target = $region56
      $region55: #{tpu_custom_call.1} parent=5 // pred_region
        %s888 = ssub.s32 %s16, 2
        // Predicated region
        $region57: #{tpu_custom_call.1} parent=55 // pred_check
          %p889 = pneg %p197
        $region58: #{tpu_custom_call.1} parent=55 // pred_check_branch
          %891 = sbr.rel (%p889) target = $region60
        $region59: #{tpu_custom_call.1} parent=55 // pred_region
          %s892 = sand.u32 %s182, 1
          %s893 = scalar_lea.sflag [#allocation3], %s892
          %s894 = sand.u32 %s182, 1
          %s895 = scalar_lea.vmem [#allocation2], %s894
          %896 = dma.done %s893, 16
        $region60: #{tpu_custom_call.1} parent=55 // pred_fallthru
          _
      $region56: #{tpu_custom_call.1} parent=5 // pred_fallthru
        _
    $region6: #{tpu_custom_call.1} parent=1 // loop_footer
      %s20 = sadd.s32 1, %s16
    $region7: #{tpu_custom_call.1} parent=1 // loop_footer_branch
      %15 = sbr.rel target = $region3
    $region8: #{tpu_custom_call.1} parent=1 // loop_exit
      _
    %897 = vsyncpa [#allocation3], 1
    %s898 = scalar_lea.sflag [#allocation3], 1
    %899 = vsyncpa %s898, 1

</llo_original>
